<compile_context>
chip_gen: v7x
topology: tpu7x:2x2x1
jax: 0.10.0
libtpu: 0.0.40
codegen_flags: <defaults>
</compile_context>

<pallas_src>
import functools

import jax
import jax.numpy as jnp
from jax import lax
from jax.experimental import pallas as pl
from jax.experimental.pallas import tpu as pltpu


def _coupling_kernel(off_ref, rnn_ref, on_ref,
                     w_in_off_ref, w_in_rnn_ref, b_in_ref,
                     w_mid_ref, b_mid_ref,
                     w_out_ref, b_out_ref,
                     on_out_ref,
                     *, n_mid, reverse):
    wdt = w_in_off_ref.dtype        # MXU operand dtype (bf16 or f32); accum f32

    # in_block: Linear(cat(off, rnn)) + ReLU as two dots into one accumulator.
    h = (jnp.dot(off_ref[...].astype(wdt), w_in_off_ref[...],
                 preferred_element_type=jnp.float32)
         + jnp.dot(rnn_ref[...].astype(wdt), w_in_rnn_ref[...],
                   preferred_element_type=jnp.float32)
         + b_in_ref[...])
    h = jnp.maximum(h, 0.0)

    def layer(hh, w, b):
        hh = jnp.dot(hh.astype(wdt), w, preferred_element_type=jnp.float32) + b
        return jnp.maximum(hh, 0.0)

    # mid_block: (hidden - 1) x [Linear + ReLU]
    if n_mid > 8:
        # Compact loop body keeps vreg/VMEM pressure flat for deep stacks.
        h = lax.fori_loop(
            0, n_mid, lambda i, hh: layer(hh, w_mid_ref[i], b_mid_ref[i]), h)
    else:
        for i in range(n_mid):
            h = layer(h, w_mid_ref[i], b_mid_ref[i])

    # out_block: Linear -> shift
    shift = (jnp.dot(h.astype(wdt), w_out_ref[...],
                     preferred_element_type=jnp.float32)
             + b_out_ref[...])

    on = on_ref[...].astype(jnp.float32)
    out = on - shift if reverse else on + shift
    on_out_ref[...] = out.astype(on_out_ref.dtype)


def _choose_batch_tile(B, block_b):
    """8-aligned batch tile; >=2 grid steps when the batch allows (megacore)."""
    if B <= 8:
        return B
    tb = max(8, (min(block_b, B) // 8) * 8)
    if tb >= B and B >= 16:
        tb = ((B + 1) // 2 + 7) // 8 * 8     # ~ceil(B/2), rounded up to 8
    return tb


def coupling_forward(x, rnn_embedding, params, *, mask_config, reverse=False,
                     block_b=512, matmul_dtype=jnp.bfloat16):
    """x: (B, W) float32, rnn_embedding: (B, E) float32."""
    B, W = x.shape
    half = W // 2
    E = rnn_embedding.shape[-1]

    x3 = x.reshape(B, half, 2)
    if mask_config:
        on, off = x3[:, :, 0], x3[:, :, 1]
    else:
        off, on = x3[:, :, 0], x3[:, :, 1]

    n_mid = params["w_mid"].shape[0]
    mid_dim = params["w_mid"].shape[-1]

    # Pre-cast MXU operands once in the wrapper (biases / accum stay f32).
    wdt = matmul_dtype
    w_in_off = params["w_in"][:half].astype(wdt)
    w_in_rnn = params["w_in"][half:].astype(wdt)
    w_mid = params["w_mid"].astype(wdt)
    w_out = params["w_out"].astype(wdt)
    b_in, b_mid, b_out = params["b_in"], params["b_mid"], params["b_out"]

    # Batch tiling / padding so every tile is 8-aligned and pipelined.
    tb = _choose_batch_tile(B, block_b)
    n_steps = pl.cdiv(B, tb)
    B_pad = n_steps * tb
    if B_pad != B:
        pad = ((0, B_pad - B), (0, 0))
        off_p = jnp.pad(off, pad)
        on_p = jnp.pad(on, pad)
        rnn_p = jnp.pad(rnn_embedding, pad)
    else:
        off_p, on_p, rnn_p = off, on, rnn_embedding

    # VMEM budget: resident weights + double-buffered activation tiles,
    # capped below physical per-core VMEM (64 MiB v7x / 128 MiB v5e,v6e).
    try:
        phys = int(getattr(pltpu.get_tpu_info(), "vmem_capacity_bytes", 64 << 20))
    except Exception:
        phys = 64 << 20
    cap = min(100 << 20, phys - (8 << 20))
    w_bytes = sum(int(a.size) * a.dtype.itemsize
                  for a in (w_in_off, w_in_rnn, b_in, w_mid, b_mid, w_out, b_out))
    act_bytes = (2 * tb * (2 * half + E) * 4      # double-buffered inputs
                 + 2 * tb * half * 4              # double-buffered output
                 + 4 * tb * mid_dim * 4)          # hidden working set headroom
    vmem_limit = int(min(max(32 << 20, w_bytes + act_bytes + (8 << 20)), cap))

    kernel = functools.partial(_coupling_kernel, n_mid=n_mid, reverse=reverse)

    def run(single_buffer_weights):
        act = lambda shape: pl.BlockSpec(shape, lambda i: (i, 0))

        def const(shape):
            idx = lambda i, _nd=len(shape): (0,) * _nd
            if single_buffer_weights:
                # Constant blocks never change: no double-buffering needed.
                return pl.BlockSpec(shape, idx, pipeline_mode=pl.Buffered(1))
            return pl.BlockSpec(shape, idx)

        return pl.pallas_call(
            kernel,
            out_shape=jax.ShapeDtypeStruct((B_pad, half), x.dtype),
            grid_spec=pltpu.PrefetchScalarGridSpec(
                num_scalar_prefetch=0,
                grid=(n_steps,),
                in_specs=[
                    act((tb, half)),          # off
                    act((tb, E)),             # rnn_embedding
                    act((tb, half)),          # on
                    const(w_in_off.shape),    # weights stay VMEM-resident
                    const(w_in_rnn.shape),
                    const(b_in.shape),
                    const(w_mid.shape),
                    const(b_mid.shape),
                    const(w_out.shape),
                    const(b_out.shape),
                ],
                out_specs=act((tb, half)),
            ),
            compiler_params=pltpu.CompilerParams(
                dimension_semantics=("parallel",),
                vmem_limit_bytes=vmem_limit),
        )(off_p, rnn_p, on_p,
          w_in_off, w_in_rnn, b_in, w_mid, b_mid, w_out, b_out)

    try:
        on_new = run(single_buffer_weights=True)
    except Exception:
        # Fallback if this Pallas build rejects pipeline_mode=pl.Buffered(1).
        on_new = run(single_buffer_weights=False)

    if B_pad != B:
        on_new = on_new[:B]

    # TODO(synk): fuse the interleave in-kernel (lane-dense (tb, W) store) to
    # drop this extra XLA pass over B x W.
    if mask_config:
        y = jnp.stack((on_new, off), axis=2)
    else:
        y = jnp.stack((off, on_new), axis=2)
    return y.reshape(B, W)


def init_params(key, len_input, mid_dim, hidden, len_rnn_embedding_input):
    """PyTorch-Linear-style init: U(-1/sqrt(fan_in), 1/sqrt(fan_in))."""
    half = len_input // 2
    n_mid = hidden - 1
    ks = jax.random.split(key, 6)

    def u(k, shape, fan_in):
        bound = 1.0 / jnp.sqrt(float(fan_in))
        return jax.random.uniform(k, shape, jnp.float32, -bound, bound)

    fan_in0 = half + len_rnn_embedding_input
    return {
        "w_in":  u(ks[0], (fan_in0, mid_dim), fan_in0),
        "b_in":  u(ks[1], (1, mid_dim), fan_in0),
        "w_mid": u(ks[2], (n_mid, mid_dim, mid_dim), mid_dim),
        "b_mid": u(ks[3], (n_mid, 1, mid_dim), mid_dim),
        "w_out": u(ks[4], (mid_dim, half), mid_dim),
        "b_out": u(ks[5], (1, half), mid_dim),
    }


def coupling_reference(x, rnn_embedding, params, *, mask_config, reverse=False):
    """Pure-JAX reference mirroring the PyTorch forward exactly."""
    B, W = x.shape
    half = W // 2
    x3 = x.reshape(B, half, 2)
    if mask_config:
        on, off = x3[:, :, 0], x3[:, :, 1]
    else:
        off, on = x3[:, :, 0], x3[:, :, 1]
    h = jnp.maximum(
        jnp.concatenate([off, rnn_embedding], axis=-1) @ params["w_in"]
        + params["b_in"], 0.0)
    for i in range(params["w_mid"].shape[0]):
        h = jnp.maximum(h @ params["w_mid"][i] + params["b_mid"][i], 0.0)
    shift = h @ params["w_out"] + params["b_out"]
    on = on - shift if reverse else on + shift
    if mask_config:
        y = jnp.stack((on, off), axis=2)
    else:
        y = jnp.stack((off, on), axis=2)
    return y.reshape(B, W)


if __name__ == "__main__":
    B = 8
    len_input = 16                 # W
    mid_dim = 32
    hidden = 3                     # -> 2 mid blocks
    E = 8                          # len_rnn_embedding_input
    mask_config = 1

    key = jax.random.PRNGKey(0)
    kx, kr, kp, kx2, kr2, kp2 = jax.random.split(key, 6)
    x = jax.random.normal(kx, (B, len_input), jnp.float32)
    rnn = jax.random.normal(kr, (B, E), jnp.float32)
    params = init_params(kp, len_input, mid_dim, hidden, E)

    # f32-MXU path (bit-tight tolerance), forward and reverse.
    for rev in (False, True):
        out = coupling_forward(x, rnn, params, mask_config=mask_config,
                               reverse=rev, matmul_dtype=jnp.float32)
        out = jax.block_until_ready(out)
        ref = coupling_reference(x, rnn, params, mask_config=mask_config,
                                 reverse=rev)
        assert out.shape == (B, len_input)
        assert jnp.allclose(out, ref, atol=1e-5, rtol=1e-5), "f32 mismatch"

    # Default (bf16-MXU, f32 accumulation) production path.
    out_bf16 = jax.block_until_ready(
        coupling_forward(x, rnn, params, mask_config=mask_config))
    ref = coupling_reference(x, rnn, params, mask_config=mask_config)
    assert jnp.allclose(out_bf16, ref, atol=3e-2, rtol=3e-2), "bf16 mismatch"

    # Non-divisible batch -> padding + multi-step grid; mask_config=0, reverse.
    B2 = 20
    x2 = jax.random.normal(kx2, (B2, len_input), jnp.float32)
    rnn2 = jax.random.normal(kr2, (B2, E), jnp.float32)
    out2 = jax.block_until_ready(
        coupling_forward(x2, rnn2, params, mask_config=0, reverse=True))
    ref2 = coupling_reference(x2, rnn2, params, mask_config=0, reverse=True)
    assert out2.shape == (B2, len_input)
    assert jnp.allclose(out2, ref2, atol=3e-2, rtol=3e-2), "padded-batch mismatch"

    # Deep mid stack (hidden=10 -> 9 mid blocks) exercises the fori_loop path.
    params_deep = init_params(kp2, len_input, mid_dim, 10, E)
    out3 = jax.block_until_ready(
        coupling_forward(x, rnn, params_deep, mask_config=mask_config))
    ref3 = coupling_reference(x, rnn, params_deep, mask_config=mask_config)
    assert jnp.allclose(out3, ref3, atol=5e-2, rtol=5e-2), "deep-stack mismatch"

    print("KERNEL_OK")
</pallas_src>

<mosaic_0001>
module attributes {stable_mosaic.version = 11 : i64} {
  func.func @_coupling_kernel(%arg0: i32, %arg1: memref<8x8xf32, #tpu.memory_space<vmem>>, %arg2: memref<8x8xf32, #tpu.memory_space<vmem>>, %arg3: memref<8x8xf32, #tpu.memory_space<vmem>>, %arg4: memref<8x32xf32, #tpu.memory_space<vmem>>, %arg5: memref<8x32xf32, #tpu.memory_space<vmem>>, %arg6: memref<1x32xf32, #tpu.memory_space<vmem>>, %arg7: memref<2x32x32xf32, #tpu.memory_space<vmem>>, %arg8: memref<2x1x32xf32, #tpu.memory_space<vmem>>, %arg9: memref<32x8xf32, #tpu.memory_space<vmem>>, %arg10: memref<1x8xf32, #tpu.memory_space<vmem>>, %arg11: memref<8x8xf32, #tpu.memory_space<vmem>>) attributes {dimension_semantics = [#tpu.dimension_semantics<parallel>], iteration_bounds = array<i64: 1>, scalar_prefetch = 0 : i64, scratch_operands = 0 : i64, tpu.core_type = #tpu.core_type<tc>, window_params = [{transform_indices = @transform_0, window_bounds = array<i64: 8, 8>}, {transform_indices = @transform_1, window_bounds = array<i64: 8, 8>}, {transform_indices = @transform_2, window_bounds = array<i64: 8, 8>}, {pipeline_mode = #tpu.pipeline_mode<synchronous>, transform_indices = @transform_3, window_bounds = array<i64: 8, 32>}, {pipeline_mode = #tpu.pipeline_mode<synchronous>, transform_indices = @transform_4, window_bounds = array<i64: 8, 32>}, {pipeline_mode = #tpu.pipeline_mode<synchronous>, transform_indices = @transform_5, window_bounds = array<i64: 1, 32>}, {pipeline_mode = #tpu.pipeline_mode<synchronous>, transform_indices = @transform_6, window_bounds = array<i64: 2, 32, 32>}, {pipeline_mode = #tpu.pipeline_mode<synchronous>, transform_indices = @transform_7, window_bounds = array<i64: 2, 1, 32>}, {pipeline_mode = #tpu.pipeline_mode<synchronous>, transform_indices = @transform_8, window_bounds = array<i64: 32, 8>}, {pipeline_mode = #tpu.pipeline_mode<synchronous>, transform_indices = @transform_9, window_bounds = array<i64: 1, 8>}, {transform_indices = @transform_10, window_bounds = array<i64: 8, 8>}]} {
    %c0 = arith.constant 0 : index
    %c0_0 = arith.constant 0 : index
    %0 = vector.load %arg1[%c0, %c0_0] : memref<8x8xf32, #tpu.memory_space<vmem>>, vector<8x8xf32>
    %c0_1 = arith.constant 0 : index
    %c0_2 = arith.constant 0 : index
    %1 = vector.load %arg4[%c0_1, %c0_2] : memref<8x32xf32, #tpu.memory_space<vmem>>, vector<8x32xf32>
    %cst = arith.constant dense<0.000000e+00> : vector<8x32xf32>
    %2 = tpu.matmul %0, %1, %cst {dimension_numbers = #tpu.dot_dimension_numbers<[1], [0], [0], [1], [0, 0, 1, 1], [], []>} : vector<8x8xf32>, vector<8x32xf32>, vector<8x32xf32> -> vector<8x32xf32>
    %c0_3 = arith.constant 0 : index
    %c0_4 = arith.constant 0 : index
    %3 = vector.load %arg2[%c0_3, %c0_4] : memref<8x8xf32, #tpu.memory_space<vmem>>, vector<8x8xf32>
    %c0_5 = arith.constant 0 : index
    %c0_6 = arith.constant 0 : index
    %4 = vector.load %arg5[%c0_5, %c0_6] : memref<8x32xf32, #tpu.memory_space<vmem>>, vector<8x32xf32>
    %cst_7 = arith.constant dense<0.000000e+00> : vector<8x32xf32>
    %5 = tpu.matmul %3, %4, %cst_7 {dimension_numbers = #tpu.dot_dimension_numbers<[1], [0], [0], [1], [0, 0, 1, 1], [], []>} : vector<8x8xf32>, vector<8x32xf32>, vector<8x32xf32> -> vector<8x32xf32>
    %6 = arith.addf %2, %5 : vector<8x32xf32>
    %c0_8 = arith.constant 0 : index
    %c0_9 = arith.constant 0 : index
    %7 = vector.load %arg6[%c0_8, %c0_9] : memref<1x32xf32, #tpu.memory_space<vmem>>, vector<1x32xf32>
    %8 = vector.broadcast %7 : vector<1x32xf32> to vector<8x32xf32>
    %9 = arith.addf %6, %8 : vector<8x32xf32>
    %cst_10 = arith.constant 0.000000e+00 : f32
    %10 = vector.broadcast %cst_10 : f32 to vector<8x32xf32>
    %11 = arith.maximumf %9, %10 : vector<8x32xf32>
    %c0_11 = arith.constant 0 : index
    %c0_12 = arith.constant 0 : index
    %c0_13 = arith.constant 0 : index
    %12 = vector.load %arg7[%c0_11, %c0_12, %c0_13] : memref<2x32x32xf32, #tpu.memory_space<vmem>>, vector<1x32x32xf32>
    %13 = vector.shape_cast %12 : vector<1x32x32xf32> to vector<32x32xf32>
    %c0_14 = arith.constant 0 : index
    %c0_15 = arith.constant 0 : index
    %c0_16 = arith.constant 0 : index
    %14 = vector.load %arg8[%c0_14, %c0_15, %c0_16] : memref<2x1x32xf32, #tpu.memory_space<vmem>>, vector<1x1x32xf32>
    %15 = vector.shape_cast %14 : vector<1x1x32xf32> to vector<1x32xf32>
    %cst_17 = arith.constant dense<0.000000e+00> : vector<8x32xf32>
    %16 = tpu.matmul %11, %13, %cst_17 {dimension_numbers = #tpu.dot_dimension_numbers<[1], [0], [0], [1], [0, 0, 1, 1], [], []>} : vector<8x32xf32>, vector<32x32xf32>, vector<8x32xf32> -> vector<8x32xf32>
    %17 = vector.broadcast %15 : vector<1x32xf32> to vector<8x32xf32>
    %18 = arith.addf %16, %17 : vector<8x32xf32>
    %cst_18 = arith.constant 0.000000e+00 : f32
    %19 = vector.broadcast %cst_18 : f32 to vector<8x32xf32>
    %20 = arith.maximumf %18, %19 : vector<8x32xf32>
    %c1 = arith.constant 1 : index
    %c0_19 = arith.constant 0 : index
    %c0_20 = arith.constant 0 : index
    %21 = vector.load %arg7[%c1, %c0_19, %c0_20] : memref<2x32x32xf32, #tpu.memory_space<vmem>>, vector<1x32x32xf32>
    %22 = vector.shape_cast %21 : vector<1x32x32xf32> to vector<32x32xf32>
    %c1_21 = arith.constant 1 : index
    %c0_22 = arith.constant 0 : index
    %c0_23 = arith.constant 0 : index
    %23 = vector.load %arg8[%c1_21, %c0_22, %c0_23] : memref<2x1x32xf32, #tpu.memory_space<vmem>>, vector<1x1x32xf32>
    %24 = vector.shape_cast %23 : vector<1x1x32xf32> to vector<1x32xf32>
    %cst_24 = arith.constant dense<0.000000e+00> : vector<8x32xf32>
    %25 = tpu.matmul %20, %22, %cst_24 {dimension_numbers = #tpu.dot_dimension_numbers<[1], [0], [0], [1], [0, 0, 1, 1], [], []>} : vector<8x32xf32>, vector<32x32xf32>, vector<8x32xf32> -> vector<8x32xf32>
    %26 = vector.broadcast %24 : vector<1x32xf32> to vector<8x32xf32>
    %27 = arith.addf %25, %26 : vector<8x32xf32>
    %cst_25 = arith.constant 0.000000e+00 : f32
    %28 = vector.broadcast %cst_25 : f32 to vector<8x32xf32>
    %29 = arith.maximumf %27, %28 : vector<8x32xf32>
    %c0_26 = arith.constant 0 : index
    %c0_27 = arith.constant 0 : index
    %30 = vector.load %arg9[%c0_26, %c0_27] : memref<32x8xf32, #tpu.memory_space<vmem>>, vector<32x8xf32>
    %cst_28 = arith.constant dense<0.000000e+00> : vector<8x8xf32>
    %31 = tpu.matmul %29, %30, %cst_28 {dimension_numbers = #tpu.dot_dimension_numbers<[1], [0], [0], [1], [0, 0, 1, 1], [], []>} : vector<8x32xf32>, vector<32x8xf32>, vector<8x8xf32> -> vector<8x8xf32>
    %c0_29 = arith.constant 0 : index
    %c0_30 = arith.constant 0 : index
    %32 = vector.load %arg10[%c0_29, %c0_30] : memref<1x8xf32, #tpu.memory_space<vmem>>, vector<1x8xf32>
    %33 = vector.broadcast %32 : vector<1x8xf32> to vector<8x8xf32>
    %34 = arith.addf %31, %33 : vector<8x8xf32>
    %c0_31 = arith.constant 0 : index
    %c0_32 = arith.constant 0 : index
    %35 = vector.load %arg3[%c0_31, %c0_32] : memref<8x8xf32, #tpu.memory_space<vmem>>, vector<8x8xf32>
    %36 = arith.addf %35, %34 : vector<8x8xf32>
    %c0_33 = arith.constant 0 : index
    %c0_34 = arith.constant 0 : index
    %37 = vector.load %arg11[%c0_33, %c0_34] : memref<8x8xf32, #tpu.memory_space<vmem>>, vector<8x8xf32>
    tpu.vector_store %arg11[%c0_33, %c0_34], %36 {strides = array<i32>} : memref<8x8xf32, #tpu.memory_space<vmem>>, vector<8x8xf32>,
    return
  }
  func.func @transform_0(%arg0: i32) -> (i32, i32) {
    %c0_i32 = arith.constant 0 : i32
    %c0_i32_0 = arith.constant 0 : i32
    return %arg0, %c0_i32 : i32, i32
  }
  func.func @transform_1(%arg0: i32) -> (i32, i32) {
    %c0_i32 = arith.constant 0 : i32
    %c0_i32_0 = arith.constant 0 : i32
    return %arg0, %c0_i32 : i32, i32
  }
  func.func @transform_2(%arg0: i32) -> (i32, i32) {
    %c0_i32 = arith.constant 0 : i32
    %c0_i32_0 = arith.constant 0 : i32
    return %arg0, %c0_i32 : i32, i32
  }
  func.func @transform_3(%arg0: i32) -> (i32, i32) {
    %c0_i32 = arith.constant 0 : i32
    %c0_i32_0 = arith.constant 0 : i32
    %c0_i32_1 = arith.constant 0 : i32
    return %c0_i32, %c0_i32_0 : i32, i32
  }
  func.func @transform_4(%arg0: i32) -> (i32, i32) {
    %c0_i32 = arith.constant 0 : i32
    %c0_i32_0 = arith.constant 0 : i32
    %c0_i32_1 = arith.constant 0 : i32
    return %c0_i32, %c0_i32_0 : i32, i32
  }
  func.func @transform_5(%arg0: i32) -> (i32, i32) {
    %c0_i32 = arith.constant 0 : i32
    %c0_i32_0 = arith.constant 0 : i32
    %c0_i32_1 = arith.constant 0 : i32
    return %c0_i32, %c0_i32_0 : i32, i32
  }
  func.func @transform_6(%arg0: i32) -> (i32, i32, i32) {
    %c0_i32 = arith.constant 0 : i32
    %c0_i32_0 = arith.constant 0 : i32
    %c0_i32_1 = arith.constant 0 : i32
    %c0_i32_2 = arith.constant 0 : i32
    return %c0_i32, %c0_i32_0, %c0_i32_1 : i32, i32, i32
  }
  func.func @transform_7(%arg0: i32) -> (i32, i32, i32) {
    %c0_i32 = arith.constant 0 : i32
    %c0_i32_0 = arith.constant 0 : i32
    %c0_i32_1 = arith.constant 0 : i32
    %c0_i32_2 = arith.constant 0 : i32
    return %c0_i32, %c0_i32_0, %c0_i32_1 : i32, i32, i32
  }
  func.func @transform_8(%arg0: i32) -> (i32, i32) {
    %c0_i32 = arith.constant 0 : i32
    %c0_i32_0 = arith.constant 0 : i32
    %c0_i32_1 = arith.constant 0 : i32
    return %c0_i32, %c0_i32_0 : i32, i32
  }
  func.func @transform_9(%arg0: i32) -> (i32, i32) {
    %c0_i32 = arith.constant 0 : i32
    %c0_i32_0 = arith.constant 0 : i32
    %c0_i32_1 = arith.constant 0 : i32
    return %c0_i32, %c0_i32_0 : i32, i32
  }
  func.func @transform_10(%arg0: i32) -> (i32, i32) {
    %c0_i32 = arith.constant 0 : i32
    %c0_i32_0 = arith.constant 0 : i32
    return %arg0, %c0_i32 : i32, i32
  }
}

module attributes {stable_mosaic.version = 11 : i64} {
  func.func @_coupling_kernel(%arg0: i32, %arg1: memref<8x8xf32, #tpu.memory_space<vmem>>, %arg2: memref<8x8xf32, #tpu.memory_space<vmem>>, %arg3: memref<8x8xf32, #tpu.memory_space<vmem>>, %arg4: memref<8x32xf32, #tpu.memory_space<vmem>>, %arg5: memref<8x32xf32, #tpu.memory_space<vmem>>, %arg6: memref<1x32xf32, #tpu.memory_space<vmem>>, %arg7: memref<2x32x32xf32, #tpu.memory_space<vmem>>, %arg8: memref<2x1x32xf32, #tpu.memory_space<vmem>>, %arg9: memref<32x8xf32, #tpu.memory_space<vmem>>, %arg10: memref<1x8xf32, #tpu.memory_space<vmem>>, %arg11: memref<8x8xf32, #tpu.memory_space<vmem>>) attributes {dimension_semantics = [#tpu.dimension_semantics<parallel>], iteration_bounds = array<i64: 1>, scalar_prefetch = 0 : i64, scratch_operands = 0 : i64, tpu.core_type = #tpu.core_type<tc>, window_params = [{transform_indices = @transform_0, window_bounds = array<i64: 8, 8>}, {transform_indices = @transform_1, window_bounds = array<i64: 8, 8>}, {transform_indices = @transform_2, window_bounds = array<i64: 8, 8>}, {pipeline_mode = #tpu.pipeline_mode<synchronous>, transform_indices = @transform_3, window_bounds = array<i64: 8, 32>}, {pipeline_mode = #tpu.pipeline_mode<synchronous>, transform_indices = @transform_4, window_bounds = array<i64: 8, 32>}, {pipeline_mode = #tpu.pipeline_mode<synchronous>, transform_indices = @transform_5, window_bounds = array<i64: 1, 32>}, {pipeline_mode = #tpu.pipeline_mode<synchronous>, transform_indices = @transform_6, window_bounds = array<i64: 2, 32, 32>}, {pipeline_mode = #tpu.pipeline_mode<synchronous>, transform_indices = @transform_7, window_bounds = array<i64: 2, 1, 32>}, {pipeline_mode = #tpu.pipeline_mode<synchronous>, transform_indices = @transform_8, window_bounds = array<i64: 32, 8>}, {pipeline_mode = #tpu.pipeline_mode<synchronous>, transform_indices = @transform_9, window_bounds = array<i64: 1, 8>}, {transform_indices = @transform_10, window_bounds = array<i64: 8, 8>}]} {
    %c0 = arith.constant 0 : index
    %c0_0 = arith.constant 0 : index
    %0 = vector.load %arg1[%c0, %c0_0] : memref<8x8xf32, #tpu.memory_space<vmem>>, vector<8x8xf32>
    %c0_1 = arith.constant 0 : index
    %c0_2 = arith.constant 0 : index
    %1 = vector.load %arg4[%c0_1, %c0_2] : memref<8x32xf32, #tpu.memory_space<vmem>>, vector<8x32xf32>
    %cst = arith.constant dense<0.000000e+00> : vector<8x32xf32>
    %2 = tpu.matmul %0, %1, %cst {dimension_numbers = #tpu.dot_dimension_numbers<[1], [0], [0], [1], [0, 0, 1, 1], [], []>} : vector<8x8xf32>, vector<8x32xf32>, vector<8x32xf32> -> vector<8x32xf32>
    %c0_3 = arith.constant 0 : index
    %c0_4 = arith.constant 0 : index
    %3 = vector.load %arg2[%c0_3, %c0_4] : memref<8x8xf32, #tpu.memory_space<vmem>>, vector<8x8xf32>
    %c0_5 = arith.constant 0 : index
    %c0_6 = arith.constant 0 : index
    %4 = vector.load %arg5[%c0_5, %c0_6] : memref<8x32xf32, #tpu.memory_space<vmem>>, vector<8x32xf32>
    %cst_7 = arith.constant dense<0.000000e+00> : vector<8x32xf32>
    %5 = tpu.matmul %3, %4, %cst_7 {dimension_numbers = #tpu.dot_dimension_numbers<[1], [0], [0], [1], [0, 0, 1, 1], [], []>} : vector<8x8xf32>, vector<8x32xf32>, vector<8x32xf32> -> vector<8x32xf32>
    %6 = arith.addf %2, %5 : vector<8x32xf32>
    %c0_8 = arith.constant 0 : index
    %c0_9 = arith.constant 0 : index
    %7 = vector.load %arg6[%c0_8, %c0_9] : memref<1x32xf32, #tpu.memory_space<vmem>>, vector<1x32xf32>
    %8 = vector.broadcast %7 : vector<1x32xf32> to vector<8x32xf32>
    %9 = arith.addf %6, %8 : vector<8x32xf32>
    %cst_10 = arith.constant 0.000000e+00 : f32
    %10 = vector.broadcast %cst_10 : f32 to vector<8x32xf32>
    %11 = arith.maximumf %9, %10 : vector<8x32xf32>
    %c0_11 = arith.constant 0 : index
    %c0_12 = arith.constant 0 : index
    %c0_13 = arith.constant 0 : index
    %12 = vector.load %arg7[%c0_11, %c0_12, %c0_13] : memref<2x32x32xf32, #tpu.memory_space<vmem>>, vector<1x32x32xf32>
    %13 = vector.shape_cast %12 : vector<1x32x32xf32> to vector<32x32xf32>
    %c0_14 = arith.constant 0 : index
    %c0_15 = arith.constant 0 : index
    %c0_16 = arith.constant 0 : index
    %14 = vector.load %arg8[%c0_14, %c0_15, %c0_16] : memref<2x1x32xf32, #tpu.memory_space<vmem>>, vector<1x1x32xf32>
    %15 = vector.shape_cast %14 : vector<1x1x32xf32> to vector<1x32xf32>
    %cst_17 = arith.constant dense<0.000000e+00> : vector<8x32xf32>
    %16 = tpu.matmul %11, %13, %cst_17 {dimension_numbers = #tpu.dot_dimension_numbers<[1], [0], [0], [1], [0, 0, 1, 1], [], []>} : vector<8x32xf32>, vector<32x32xf32>, vector<8x32xf32> -> vector<8x32xf32>
    %17 = vector.broadcast %15 : vector<1x32xf32> to vector<8x32xf32>
    %18 = arith.addf %16, %17 : vector<8x32xf32>
    %cst_18 = arith.constant 0.000000e+00 : f32
    %19 = vector.broadcast %cst_18 : f32 to vector<8x32xf32>
    %20 = arith.maximumf %18, %19 : vector<8x32xf32>
    %c1 = arith.constant 1 : index
    %c0_19 = arith.constant 0 : index
    %c0_20 = arith.constant 0 : index
    %21 = vector.load %arg7[%c1, %c0_19, %c0_20] : memref<2x32x32xf32, #tpu.memory_space<vmem>>, vector<1x32x32xf32>
    %22 = vector.shape_cast %21 : vector<1x32x32xf32> to vector<32x32xf32>
    %c1_21 = arith.constant 1 : index
    %c0_22 = arith.constant 0 : index
    %c0_23 = arith.constant 0 : index
    %23 = vector.load %arg8[%c1_21, %c0_22, %c0_23] : memref<2x1x32xf32, #tpu.memory_space<vmem>>, vector<1x1x32xf32>
    %24 = vector.shape_cast %23 : vector<1x1x32xf32> to vector<1x32xf32>
    %cst_24 = arith.constant dense<0.000000e+00> : vector<8x32xf32>
    %25 = tpu.matmul %20, %22, %cst_24 {dimension_numbers = #tpu.dot_dimension_numbers<[1], [0], [0], [1], [0, 0, 1, 1], [], []>} : vector<8x32xf32>, vector<32x32xf32>, vector<8x32xf32> -> vector<8x32xf32>
    %26 = vector.broadcast %24 : vector<1x32xf32> to vector<8x32xf32>
    %27 = arith.addf %25, %26 : vector<8x32xf32>
    %cst_25 = arith.constant 0.000000e+00 : f32
    %28 = vector.broadcast %cst_25 : f32 to vector<8x32xf32>
    %29 = arith.maximumf %27, %28 : vector<8x32xf32>
    %c0_26 = arith.constant 0 : index
    %c0_27 = arith.constant 0 : index
    %30 = vector.load %arg9[%c0_26, %c0_27] : memref<32x8xf32, #tpu.memory_space<vmem>>, vector<32x8xf32>
    %cst_28 = arith.constant dense<0.000000e+00> : vector<8x8xf32>
    %31 = tpu.matmul %29, %30, %cst_28 {dimension_numbers = #tpu.dot_dimension_numbers<[1], [0], [0], [1], [0, 0, 1, 1], [], []>} : vector<8x32xf32>, vector<32x8xf32>, vector<8x8xf32> -> vector<8x8xf32>
    %c0_29 = arith.constant 0 : index
    %c0_30 = arith.constant 0 : index
    %32 = vector.load %arg10[%c0_29, %c0_30] : memref<1x8xf32, #tpu.memory_space<vmem>>, vector<1x8xf32>
    %33 = vector.broadcast %32 : vector<1x8xf32> to vector<8x8xf32>
    %34 = arith.addf %31, %33 : vector<8x8xf32>
    %c0_31 = arith.constant 0 : index
    %c0_32 = arith.constant 0 : index
    %35 = vector.load %arg3[%c0_31, %c0_32] : memref<8x8xf32, #tpu.memory_space<vmem>>, vector<8x8xf32>
    %36 = arith.addf %35, %34 : vector<8x8xf32>
    %c0_33 = arith.constant 0 : index
    %c0_34 = arith.constant 0 : index
    %37 = vector.load %arg11[%c0_33, %c0_34] : memref<8x8xf32, #tpu.memory_space<vmem>>, vector<8x8xf32>
    tpu.vector_store %arg11[%c0_33, %c0_34], %36 {strides = array<i32>} : memref<8x8xf32, #tpu.memory_space<vmem>>, vector<8x8xf32>,
    return
  }
  func.func @transform_0(%arg0: i32) -> (i32, i32) {
    %c0_i32 = arith.constant 0 : i32
    %c0_i32_0 = arith.constant 0 : i32
    return %arg0, %c0_i32 : i32, i32
  }
  func.func @transform_1(%arg0: i32) -> (i32, i32) {
    %c0_i32 = arith.constant 0 : i32
    %c0_i32_0 = arith.constant 0 : i32
    return %arg0, %c0_i32 : i32, i32
  }
  func.func @transform_2(%arg0: i32) -> (i32, i32) {
    %c0_i32 = arith.constant 0 : i32
    %c0_i32_0 = arith.constant 0 : i32
    return %arg0, %c0_i32 : i32, i32
  }
  func.func @transform_3(%arg0: i32) -> (i32, i32) {
    %c0_i32 = arith.constant 0 : i32
    %c0_i32_0 = arith.constant 0 : i32
    %c0_i32_1 = arith.constant 0 : i32
    return %c0_i32, %c0_i32_0 : i32, i32
  }
  func.func @transform_4(%arg0: i32) -> (i32, i32) {
    %c0_i32 = arith.constant 0 : i32
    %c0_i32_0 = arith.constant 0 : i32
    %c0_i32_1 = arith.constant 0 : i32
    return %c0_i32, %c0_i32_0 : i32, i32
  }
  func.func @transform_5(%arg0: i32) -> (i32, i32) {
    %c0_i32 = arith.constant 0 : i32
    %c0_i32_0 = arith.constant 0 : i32
    %c0_i32_1 = arith.constant 0 : i32
    return %c0_i32, %c0_i32_0 : i32, i32
  }
  func.func @transform_6(%arg0: i32) -> (i32, i32, i32) {
    %c0_i32 = arith.constant 0 : i32
    %c0_i32_0 = arith.constant 0 : i32
    %c0_i32_1 = arith.constant 0 : i32
    %c0_i32_2 = arith.constant 0 : i32
    return %c0_i32, %c0_i32_0, %c0_i32_1 : i32, i32, i32
  }
  func.func @transform_7(%arg0: i32) -> (i32, i32, i32) {
    %c0_i32 = arith.constant 0 : i32
    %c0_i32_0 = arith.constant 0 : i32
    %c0_i32_1 = arith.constant 0 : i32
    %c0_i32_2 = arith.constant 0 : i32
    return %c0_i32, %c0_i32_0, %c0_i32_1 : i32, i32, i32
  }
  func.func @transform_8(%arg0: i32) -> (i32, i32) {
    %c0_i32 = arith.constant 0 : i32
    %c0_i32_0 = arith.constant 0 : i32
    %c0_i32_1 = arith.constant 0 : i32
    return %c0_i32, %c0_i32_0 : i32, i32
  }
  func.func @transform_9(%arg0: i32) -> (i32, i32) {
    %c0_i32 = arith.constant 0 : i32
    %c0_i32_0 = arith.constant 0 : i32
    %c0_i32_1 = arith.constant 0 : i32
    return %c0_i32, %c0_i32_0 : i32, i32
  }
  func.func @transform_10(%arg0: i32) -> (i32, i32) {
    %c0_i32 = arith.constant 0 : i32
    %c0_i32_0 = arith.constant 0 : i32
    return %arg0, %c0_i32 : i32, i32
  }
}

</mosaic_0001>

<llo_original>
// kernel: tpu_custom_call.1
$region0: #{tpu_custom_call.1}
  #allocation0 [shape = 'u32[]', space=smem, size = 0x4, offset = 0x4, fixed_abs, tag = 'smem constant byte address 0x4 - core index']
  #allocation1 [shape = 'u32[144,128]{1,0:T(1,128)}', space=vmem, size = 0x12000, scoped, tag = 'internal scratch']
  %s0 = inlined_call_operand.vmem [shape: f32[8,8], index: 0, kind: input, shape index: {}]
  %s1 = inlined_call_operand.vmem [shape: f32[8,8], index: 1, kind: input, shape index: {}]
  %s2 = inlined_call_operand.vmem [shape: f32[8,8], index: 2, kind: input, shape index: {}]
  %s3 = inlined_call_operand.vmem [shape: f32[8,32], index: 3, kind: input, shape index: {}]
  %s4 = inlined_call_operand.vmem [shape: f32[8,32], index: 4, kind: input, shape index: {}]
  %s5 = inlined_call_operand.vmem [shape: f32[1,32], index: 5, kind: input, shape index: {}]
  %s6 = inlined_call_operand.hbm [shape: f32[2,32,32], index: 6, kind: input, shape index: {}]
  %s7 = inlined_call_operand.vmem [shape: f32[2,1,32], index: 7, kind: input, shape index: {}]
  %s8 = inlined_call_operand.vmem [shape: f32[32,8], index: 8, kind: input, shape index: {}]
  %s9 = inlined_call_operand.vmem [shape: f32[1,8], index: 9, kind: input, shape index: {}]
  %s10 = inlined_call_operand.hbm [shape: f32[8,8], index: 10, kind: output, shape index: {}]
  %s11 = sld [smem:[#allocation0]]
  $region54: #{tpu_custom_call.1} parent=0
    _
  %s13 = ssub.s32 1, %s11
  %s14 = scalar_select 0, %s13, %s11
  $region1: #{tpu_custom_call.1} parent=0
    #allocation2 [shape = 'u8[32768]{0}', space=vmem, size = 0x8000, scoped, tag = 'input window, operand 6, single buffered']
    #allocation3 [shape = 's32[1]{0}', space=sflag, size = 0x4, scoped, tag = 'scoped memory for tpu_custom_call.1']
    #allocation4 [shape = 's32[1]{0}', space=sflag, size = 0x4, scoped, tag = 'scoped memory for tpu_custom_call.1']
    #allocation5 [shape = 'u8[4096]{0}', space=vmem, size = 0x1000, scoped, tag = 'output window, operand 0, single buffered']
    %15 = vsyncpa [#allocation3], 0
    %16 = vsyncpa [#allocation4], 0
    // Predicated region
    $region2: #{tpu_custom_call.1} parent=1 // pred_check
      _
    $region3: #{tpu_custom_call.1} parent=1 // pred_check_branch
      %18 = sbr.rel (0) target = $region5
    $region4: #{tpu_custom_call.1} parent=1 // pred_region
      _
    $region5: #{tpu_custom_call.1} parent=1 // pred_fallthru
      _
    // Predicated region
    $region6: #{tpu_custom_call.1} parent=1 // pred_check
      _
    $region7: #{tpu_custom_call.1} parent=1 // pred_check_branch
      %20 = sbr.rel (0) target = $region9
    $region8: #{tpu_custom_call.1} parent=1 // pred_region
      _
    $region9: #{tpu_custom_call.1} parent=1 // pred_fallthru
      _
    // Predicated region
    $region10: #{tpu_custom_call.1} parent=1 // pred_check
      _
    $region11: #{tpu_custom_call.1} parent=1 // pred_check_branch
      %22 = sbr.rel (0) target = $region13
    $region12: #{tpu_custom_call.1} parent=1 // pred_region
      _
    $region13: #{tpu_custom_call.1} parent=1 // pred_fallthru
      _
    // Predicated region
    $region14: #{tpu_custom_call.1} parent=1 // pred_check
      _
    $region15: #{tpu_custom_call.1} parent=1 // pred_check_branch
      %24 = sbr.rel (0) target = $region17
    $region16: #{tpu_custom_call.1} parent=1 // pred_region
      _
    $region17: #{tpu_custom_call.1} parent=1 // pred_fallthru
      _
    // Predicated region
    $region18: #{tpu_custom_call.1} parent=1 // pred_check
      _
    $region19: #{tpu_custom_call.1} parent=1 // pred_check_branch
      %26 = sbr.rel (0) target = $region21
    $region20: #{tpu_custom_call.1} parent=1 // pred_region
      _
    $region21: #{tpu_custom_call.1} parent=1 // pred_fallthru
      _
    // Predicated region
    $region22: #{tpu_custom_call.1} parent=1 // pred_check
      _
    $region23: #{tpu_custom_call.1} parent=1 // pred_check_branch
      %28 = sbr.rel (0) target = $region25
    $region24: #{tpu_custom_call.1} parent=1 // pred_region
      _
    $region25: #{tpu_custom_call.1} parent=1 // pred_fallthru
      _
    // Predicated region
    $region26: #{tpu_custom_call.1} parent=1 // pred_check
      _
    $region27: #{tpu_custom_call.1} parent=1 // pred_check_branch
      %30 = sbr.rel (0) target = $region29
    $region28: #{tpu_custom_call.1} parent=1 // pred_region
      %s32 = ssub.s32 1024, 1024
      %33 = vsyncadd [#allocation3], %s32
      %s34 = sshll.u32 [#allocation2], 4
      %s35 = int_to_ptr.vmem [resolvable:$true] %s34
      %40 = dma.hbm_to_vmem [thread:$0]  %s6, 1024, %s35, [#allocation3], 128, 128, 8
    $region29: #{tpu_custom_call.1} parent=1 // pred_fallthru
      _
    // Predicated region
    $region30: #{tpu_custom_call.1} parent=1 // pred_check
      _
    $region31: #{tpu_custom_call.1} parent=1 // pred_check_branch
      %42 = sbr.rel (0) target = $region33
    $region32: #{tpu_custom_call.1} parent=1 // pred_region
      _
    $region33: #{tpu_custom_call.1} parent=1 // pred_fallthru
      _
    // Predicated region
    $region34: #{tpu_custom_call.1} parent=1 // pred_check
      _
    $region35: #{tpu_custom_call.1} parent=1 // pred_check_branch
      %44 = sbr.rel (0) target = $region37
    $region36: #{tpu_custom_call.1} parent=1 // pred_region
      _
    $region37: #{tpu_custom_call.1} parent=1 // pred_fallthru
      _
    // Predicated region
    $region38: #{tpu_custom_call.1} parent=1 // pred_check
      _
    $region39: #{tpu_custom_call.1} parent=1 // pred_check_branch
      %46 = sbr.rel (0) target = $region41
    $region40: #{tpu_custom_call.1} parent=1 // pred_region
      _
    $region41: #{tpu_custom_call.1} parent=1 // pred_fallthru
      _
    // Predicated region
    $region42: #{tpu_custom_call.1} parent=1 // pred_check
      _
    $region43: #{tpu_custom_call.1} parent=1 // pred_check_branch
      %48 = sbr.rel (0) target = $region45
    $region44: #{tpu_custom_call.1} parent=1 // pred_region
      %49 = dma.done [#allocation3], 1024
    $region45: #{tpu_custom_call.1} parent=1 // pred_fallthru
      _
    %v50 = vld [vmem:[%s0] sm:$0xff]
    %v51 = vld [vmem:[%s3] sm:$0xff]
    %v52 = vld [vmem:[%s1] sm:$0xff]
    %v53 = vld [vmem:[%s4] sm:$0xff]
    %vm54 = vcmask 64512
    %v56 = vsel %vm54, %v52, 0
    %58 = vmatprep.subr.mxu0 0.0
    %59 = vmatpush1.msra.mxu0 %v53
    %60 = vmatprep.subr.mxu0 0.0
    %61 = vmatpush1.msra.mxu0 0.0
    %62 = vmatprep.subr.mxu0 0.0
    %63 = vmatpush1.msra.mxu0 0.0
    %64 = vmatprep.subr.mxu0 0.0
    %65 = vmatpush1.msra.mxu0 0.0
    %66 = vmatprep.subr.mxu0 0.0
    %67 = vmatpush1.msra.mxu0 0.0
    %68 = vmatprep.subr.mxu0 0.0
    %69 = vmatpush1.msra.mxu0 0.0
    %70 = vmatprep.subr.mxu0 0.0
    %71 = vmatpush1.msra.mxu0 0.0
    %72 = vmatprep.subr.mxu0 0.0
    %73 = vmatpush1.msra.mxu0 0.0
    %74 = vmatprep.subr.mxu0 0.0
    %75 = vmatpush1.msra.mxu0 0.0
    %76 = vmatprep.subr.mxu0 0.0
    %77 = vmatpush1.msra.mxu0 0.0
    %78 = vmatprep.subr.mxu0 0.0
    %79 = vmatpush1.msra.mxu0 0.0
    %80 = vmatprep.subr.mxu0 0.0
    %81 = vmatpush1.msra.mxu0 0.0
    %82 = vmatprep.subr.mxu0 0.0
    %83 = vmatpush1.msra.mxu0 0.0
    %84 = vmatprep.subr.mxu0 0.0
    %85 = vmatpush1.msra.mxu0 0.0
    %86 = vmatprep.subr.mxu0 0.0
    %87 = vmatpush1.msra.mxu0 0.0
    %88 = vmatprep.subr.mxu0 0.0
    %89 = vmatpush1.msra.mxu0 0.0
    %90 = vmatprep.subr.mxu0 0.0
    %91 = vmatpush1.msra.mxu0 0.0
    %92 = vmatprep.subr.mxu0 0.0
    %93 = vmatpush1.msra.mxu0 0.0
    %94 = vmatprep.subr.mxu0 0.0
    %95 = vmatpush1.msra.mxu0 0.0
    %96 = vmatprep.subr.mxu0 0.0
    %97 = vmatpush1.msra.mxu0 0.0
    %98 = vmatprep.subr.mxu0 0.0
    %99 = vmatpush1.msra.mxu0 0.0
    %100 = vmatprep.subr.mxu0 0.0
    %101 = vmatpush1.msra.mxu0 0.0
    %102 = vmatprep.subr.mxu0 0.0
    %103 = vmatpush1.msra.mxu0 0.0
    %104 = vmatprep.subr.mxu0 0.0
    %105 = vmatpush1.msra.mxu0 0.0
    %106 = vmatprep.subr.mxu0 0.0
    %107 = vmatpush1.msra.mxu0 0.0
    %108 = vmatprep.subr.mxu0 0.0
    %109 = vmatpush1.msra.mxu0 0.0
    %110 = vmatprep.subr.mxu0 0.0
    %111 = vmatpush1.msra.mxu0 0.0
    %112 = vmatprep.subr.mxu0 0.0
    %113 = vmatpush1.msra.mxu0 0.0
    %114 = vmatprep.subr.mxu0 0.0
    %115 = vmatpush1.msra.mxu0 0.0
    %116 = vmatprep.subr.mxu0 0.0
    %117 = vmatpush1.msra.mxu0 0.0
    %118 = vmatprep.subr.mxu0 0.0
    %119 = vmatpush1.msra.mxu0 0.0
    %120 = vmatprep.subr.mxu0 0.0
    %121 = vmatpush1.msra.mxu0 0.0
    %122 = vmatprep.mubr.f32.mxu0 0.0
    %123 = vmatmul.mubr.f32.gmra.mrb[0].mxu0 %v56
    %v124 = vpop.f32.mrb[0].mxu0
    %v125 = vadd.f32 0.0, %v124
    %v126 = vpop.f32.mrb[0].mxu0
    %127 = vdwg.mxu0
    %v129 = vsel %vm54, %v50, 0
    %131 = vmatprep.subr.mxu0 0.0
    %132 = vmatpush1.msra.mxu0 %v51
    %133 = vmatprep.subr.mxu0 0.0
    %134 = vmatpush1.msra.mxu0 0.0
    %135 = vmatprep.subr.mxu0 0.0
    %136 = vmatpush1.msra.mxu0 0.0
    %137 = vmatprep.subr.mxu0 0.0
    %138 = vmatpush1.msra.mxu0 0.0
    %139 = vmatprep.subr.mxu0 0.0
    %140 = vmatpush1.msra.mxu0 0.0
    %141 = vmatprep.subr.mxu0 0.0
    %142 = vmatpush1.msra.mxu0 0.0
    %143 = vmatprep.subr.mxu0 0.0
    %144 = vmatpush1.msra.mxu0 0.0
    %145 = vmatprep.subr.mxu0 0.0
    %146 = vmatpush1.msra.mxu0 0.0
    %147 = vmatprep.subr.mxu0 0.0
    %148 = vmatpush1.msra.mxu0 0.0
    %149 = vmatprep.subr.mxu0 0.0
    %150 = vmatpush1.msra.mxu0 0.0
    %151 = vmatprep.subr.mxu0 0.0
    %152 = vmatpush1.msra.mxu0 0.0
    %153 = vmatprep.subr.mxu0 0.0
    %154 = vmatpush1.msra.mxu0 0.0
    %155 = vmatprep.subr.mxu0 0.0
    %156 = vmatpush1.msra.mxu0 0.0
    %157 = vmatprep.subr.mxu0 0.0
    %158 = vmatpush1.msra.mxu0 0.0
    %159 = vmatprep.subr.mxu0 0.0
    %160 = vmatpush1.msra.mxu0 0.0
    %161 = vmatprep.subr.mxu0 0.0
    %162 = vmatpush1.msra.mxu0 0.0
    %163 = vmatprep.subr.mxu0 0.0
    %164 = vmatpush1.msra.mxu0 0.0
    %165 = vmatprep.subr.mxu0 0.0
    %166 = vmatpush1.msra.mxu0 0.0
    %167 = vmatprep.subr.mxu0 0.0
    %168 = vmatpush1.msra.mxu0 0.0
    %169 = vmatprep.subr.mxu0 0.0
    %170 = vmatpush1.msra.mxu0 0.0
    %171 = vmatprep.subr.mxu0 0.0
    %172 = vmatpush1.msra.mxu0 0.0
    %173 = vmatprep.subr.mxu0 0.0
    %174 = vmatpush1.msra.mxu0 0.0
    %175 = vmatprep.subr.mxu0 0.0
    %176 = vmatpush1.msra.mxu0 0.0
    %177 = vmatprep.subr.mxu0 0.0
    %178 = vmatpush1.msra.mxu0 0.0
    %179 = vmatprep.subr.mxu0 0.0
    %180 = vmatpush1.msra.mxu0 0.0
    %181 = vmatprep.subr.mxu0 0.0
    %182 = vmatpush1.msra.mxu0 0.0
    %183 = vmatprep.subr.mxu0 0.0
    %184 = vmatpush1.msra.mxu0 0.0
    %185 = vmatprep.subr.mxu0 0.0
    %186 = vmatpush1.msra.mxu0 0.0
    %187 = vmatprep.subr.mxu0 0.0
    %188 = vmatpush1.msra.mxu0 0.0
    %189 = vmatprep.subr.mxu0 0.0
    %190 = vmatpush1.msra.mxu0 0.0
    %191 = vmatprep.subr.mxu0 0.0
    %192 = vmatpush1.msra.mxu0 0.0
    %193 = vmatprep.subr.mxu0 0.0
    %194 = vmatpush1.msra.mxu0 0.0
    %195 = vmatprep.mubr.f32.mxu0 0.0
    %196 = vmatmul.mubr.f32.gmra.mrb[0].mxu0 %v129
    %v197 = vpop.f32.mrb[0].mxu0
    %v198 = vadd.f32 %v125, %v197
    %v199 = vpop.f32.mrb[0].mxu0
    %200 = vdwg.mxu0
    %v201 = vld [vmem:[%s5] sm:$0x1]
    %v203 = vlaneseq
    %v204 = vshrl.u32 %v203, 7
    %v205 = vsub.s32 0, %v204
    %v206 = vrot.slane %v201, %v205
    %v208 = vadd.f32 %v198, %v206
    %v209 = vmax.f32 %v208, 0.0
    %v210 = vld [vmem:[#allocation2] sm:$0xff]
    %v211 = vld [vmem:[#allocation2 + $0x8] sm:$0xff]
    %v212 = vld [vmem:[#allocation2 + $0x10] sm:$0xff]
    %v213 = vld [vmem:[#allocation2 + $0x18] sm:$0xff]
    %v214 = vld [vmem:[%s7] sm:$0x1]
    %v216 = vlaneseq
    %v217 = vshrl.u32 %v216, 7
    %v218 = vsub.s32 0, %v217
    %v219 = vrot.slane %v214, %v218
    %vm221 = vcmask 261120
    %v223 = vsel %vm221, %v209, 0
    %225 = vmatprep.subr.mxu0 0.0
    %226 = vmatpush1.msra.mxu0 %v210
    %227 = vmatprep.subr.mxu0 0.0
    %228 = vmatpush1.msra.mxu0 %v211
    %229 = vmatprep.subr.mxu0 0.0
    %230 = vmatpush1.msra.mxu0 %v212
    %231 = vmatprep.subr.mxu0 0.0
    %232 = vmatpush1.msra.mxu0 %v213
    %233 = vmatprep.subr.mxu0 0.0
    %234 = vmatpush1.msra.mxu0 0.0
    %235 = vmatprep.subr.mxu0 0.0
    %236 = vmatpush1.msra.mxu0 0.0
    %237 = vmatprep.subr.mxu0 0.0
    %238 = vmatpush1.msra.mxu0 0.0
    %239 = vmatprep.subr.mxu0 0.0
    %240 = vmatpush1.msra.mxu0 0.0
    %241 = vmatprep.subr.mxu0 0.0
    %242 = vmatpush1.msra.mxu0 0.0
    %243 = vmatprep.subr.mxu0 0.0
    %244 = vmatpush1.msra.mxu0 0.0
    %245 = vmatprep.subr.mxu0 0.0
    %246 = vmatpush1.msra.mxu0 0.0
    %247 = vmatprep.subr.mxu0 0.0
    %248 = vmatpush1.msra.mxu0 0.0
    %249 = vmatprep.subr.mxu0 0.0
    %250 = vmatpush1.msra.mxu0 0.0
    %251 = vmatprep.subr.mxu0 0.0
    %252 = vmatpush1.msra.mxu0 0.0
    %253 = vmatprep.subr.mxu0 0.0
    %254 = vmatpush1.msra.mxu0 0.0
    %255 = vmatprep.subr.mxu0 0.0
    %256 = vmatpush1.msra.mxu0 0.0
    %257 = vmatprep.subr.mxu0 0.0
    %258 = vmatpush1.msra.mxu0 0.0
    %259 = vmatprep.subr.mxu0 0.0
    %260 = vmatpush1.msra.mxu0 0.0
    %261 = vmatprep.subr.mxu0 0.0
    %262 = vmatpush1.msra.mxu0 0.0
    %263 = vmatprep.subr.mxu0 0.0
    %264 = vmatpush1.msra.mxu0 0.0
    %265 = vmatprep.subr.mxu0 0.0
    %266 = vmatpush1.msra.mxu0 0.0
    %267 = vmatprep.subr.mxu0 0.0
    %268 = vmatpush1.msra.mxu0 0.0
    %269 = vmatprep.subr.mxu0 0.0
    %270 = vmatpush1.msra.mxu0 0.0
    %271 = vmatprep.subr.mxu0 0.0
    %272 = vmatpush1.msra.mxu0 0.0
    %273 = vmatprep.subr.mxu0 0.0
    %274 = vmatpush1.msra.mxu0 0.0
    %275 = vmatprep.subr.mxu0 0.0
    %276 = vmatpush1.msra.mxu0 0.0
    %277 = vmatprep.subr.mxu0 0.0
    %278 = vmatpush1.msra.mxu0 0.0
    %279 = vmatprep.subr.mxu0 0.0
    %280 = vmatpush1.msra.mxu0 0.0
    %281 = vmatprep.subr.mxu0 0.0
    %282 = vmatpush1.msra.mxu0 0.0
    %283 = vmatprep.subr.mxu0 0.0
    %284 = vmatpush1.msra.mxu0 0.0
    %285 = vmatprep.subr.mxu0 0.0
    %286 = vmatpush1.msra.mxu0 0.0
    %287 = vmatprep.subr.mxu0 0.0
    %288 = vmatpush1.msra.mxu0 0.0
    %289 = vmatprep.mubr.f32.mxu0 0.0
    %290 = vmatmul.mubr.f32.gmra.mrb[0].mxu0 %v223
    %v291 = vpop.f32.mrb[0].mxu0
    %v292 = vadd.f32 %v219, %v291
    %v293 = vpop.f32.mrb[0].mxu0
    %294 = vdwg.mxu0
    %v295 = vmax.f32 %v292, 0.0
    %s296 = scalar_lea.vmem [#allocation2], 32
    %v297 = vld [vmem:[%s296] sm:$0xff]
    %v298 = vld [vmem:[%s296 + $0x8] sm:$0xff]
    %v299 = vld [vmem:[%s296 + $0x10] sm:$0xff]
    %v300 = vld [vmem:[%s296 + $0x18] sm:$0xff]
    %s301 = scalar_lea.vmem %s7, 1
    %v302 = vld [vmem:[%s301] sm:$0x1]
    %v304 = vlaneseq
    %v305 = vshrl.u32 %v304, 7
    %v306 = vsub.s32 0, %v305
    %v307 = vrot.slane %v302, %v306
    %v310 = vsel %vm221, %v295, 0
    %312 = vmatprep.subr.mxu0 0.0
    %313 = vmatpush1.msra.mxu0 %v297
    %314 = vmatprep.subr.mxu0 0.0
    %315 = vmatpush1.msra.mxu0 %v298
    %316 = vmatprep.subr.mxu0 0.0
    %317 = vmatpush1.msra.mxu0 %v299
    %318 = vmatprep.subr.mxu0 0.0
    %319 = vmatpush1.msra.mxu0 %v300
    %320 = vmatprep.subr.mxu0 0.0
    %321 = vmatpush1.msra.mxu0 0.0
    %322 = vmatprep.subr.mxu0 0.0
    %323 = vmatpush1.msra.mxu0 0.0
    %324 = vmatprep.subr.mxu0 0.0
    %325 = vmatpush1.msra.mxu0 0.0
    %326 = vmatprep.subr.mxu0 0.0
    %327 = vmatpush1.msra.mxu0 0.0
    %328 = vmatprep.subr.mxu0 0.0
    %329 = vmatpush1.msra.mxu0 0.0
    %330 = vmatprep.subr.mxu0 0.0
    %331 = vmatpush1.msra.mxu0 0.0
    %332 = vmatprep.subr.mxu0 0.0
    %333 = vmatpush1.msra.mxu0 0.0
    %334 = vmatprep.subr.mxu0 0.0
    %335 = vmatpush1.msra.mxu0 0.0
    %336 = vmatprep.subr.mxu0 0.0
    %337 = vmatpush1.msra.mxu0 0.0
    %338 = vmatprep.subr.mxu0 0.0
    %339 = vmatpush1.msra.mxu0 0.0
    %340 = vmatprep.subr.mxu0 0.0
    %341 = vmatpush1.msra.mxu0 0.0
    %342 = vmatprep.subr.mxu0 0.0
    %343 = vmatpush1.msra.mxu0 0.0
    %344 = vmatprep.subr.mxu0 0.0
    %345 = vmatpush1.msra.mxu0 0.0
    %346 = vmatprep.subr.mxu0 0.0
    %347 = vmatpush1.msra.mxu0 0.0
    %348 = vmatprep.subr.mxu0 0.0
    %349 = vmatpush1.msra.mxu0 0.0
    %350 = vmatprep.subr.mxu0 0.0
    %351 = vmatpush1.msra.mxu0 0.0
    %352 = vmatprep.subr.mxu0 0.0
    %353 = vmatpush1.msra.mxu0 0.0
    %354 = vmatprep.subr.mxu0 0.0
    %355 = vmatpush1.msra.mxu0 0.0
    %356 = vmatprep.subr.mxu0 0.0
    %357 = vmatpush1.msra.mxu0 0.0
    %358 = vmatprep.subr.mxu0 0.0
    %359 = vmatpush1.msra.mxu0 0.0
    %360 = vmatprep.subr.mxu0 0.0
    %361 = vmatpush1.msra.mxu0 0.0
    %362 = vmatprep.subr.mxu0 0.0
    %363 = vmatpush1.msra.mxu0 0.0
    %364 = vmatprep.subr.mxu0 0.0
    %365 = vmatpush1.msra.mxu0 0.0
    %366 = vmatprep.subr.mxu0 0.0
    %367 = vmatpush1.msra.mxu0 0.0
    %368 = vmatprep.subr.mxu0 0.0
    %369 = vmatpush1.msra.mxu0 0.0
    %370 = vmatprep.subr.mxu0 0.0
    %371 = vmatpush1.msra.mxu0 0.0
    %372 = vmatprep.subr.mxu0 0.0
    %373 = vmatpush1.msra.mxu0 0.0
    %374 = vmatprep.subr.mxu0 0.0
    %375 = vmatpush1.msra.mxu0 0.0
    %376 = vmatprep.mubr.f32.mxu0 0.0
    %377 = vmatmul.mubr.f32.gmra.mrb[0].mxu0 %v310
    %v378 = vpop.f32.mrb[0].mxu0
    %v379 = vadd.f32 %v307, %v378
    %v380 = vpop.f32.mrb[0].mxu0
    %381 = vdwg.mxu0
    %v382 = vmax.f32 %v379, 0.0
    %v383 = vld [vmem:[%s8] sm:$0xff]
    %v384 = vld [vmem:[%s8 + $0x8] sm:$0xff]
    %v385 = vld [vmem:[%s8 + $0x10] sm:$0xff]
    %v386 = vld [vmem:[%s8 + $0x18] sm:$0xff]
    %v387 = vld [vmem:[%s9] sm:$0x1]
    %v389 = vlaneseq
    %v390 = vshrl.u32 %v389, 7
    %v391 = vsub.s32 0, %v390
    %v392 = vrot.slane %v387, %v391
    %v395 = vsel %vm221, %v382, 0
    %397 = vmatprep.subr.mxu0 0.0
    %398 = vmatpush1.msra.mxu0 %v383
    %399 = vmatprep.subr.mxu0 0.0
    %400 = vmatpush1.msra.mxu0 %v384
    %401 = vmatprep.subr.mxu0 0.0
    %402 = vmatpush1.msra.mxu0 %v385
    %403 = vmatprep.subr.mxu0 0.0
    %404 = vmatpush1.msra.mxu0 %v386
    %405 = vmatprep.subr.mxu0 0.0
    %406 = vmatpush1.msra.mxu0 0.0
    %407 = vmatprep.subr.mxu0 0.0
    %408 = vmatpush1.msra.mxu0 0.0
    %409 = vmatprep.subr.mxu0 0.0
    %410 = vmatpush1.msra.mxu0 0.0
    %411 = vmatprep.subr.mxu0 0.0
    %412 = vmatpush1.msra.mxu0 0.0
    %413 = vmatprep.subr.mxu0 0.0
    %414 = vmatpush1.msra.mxu0 0.0
    %415 = vmatprep.subr.mxu0 0.0
    %416 = vmatpush1.msra.mxu0 0.0
    %417 = vmatprep.subr.mxu0 0.0
    %418 = vmatpush1.msra.mxu0 0.0
    %419 = vmatprep.subr.mxu0 0.0
    %420 = vmatpush1.msra.mxu0 0.0
    %421 = vmatprep.subr.mxu0 0.0
    %422 = vmatpush1.msra.mxu0 0.0
    %423 = vmatprep.subr.mxu0 0.0
    %424 = vmatpush1.msra.mxu0 0.0
    %425 = vmatprep.subr.mxu0 0.0
    %426 = vmatpush1.msra.mxu0 0.0
    %427 = vmatprep.subr.mxu0 0.0
    %428 = vmatpush1.msra.mxu0 0.0
    %429 = vmatprep.subr.mxu0 0.0
    %430 = vmatpush1.msra.mxu0 0.0
    %431 = vmatprep.subr.mxu0 0.0
    %432 = vmatpush1.msra.mxu0 0.0
    %433 = vmatprep.subr.mxu0 0.0
    %434 = vmatpush1.msra.mxu0 0.0
    %435 = vmatprep.subr.mxu0 0.0
    %436 = vmatpush1.msra.mxu0 0.0
    %437 = vmatprep.subr.mxu0 0.0
    %438 = vmatpush1.msra.mxu0 0.0
    %439 = vmatprep.subr.mxu0 0.0
    %440 = vmatpush1.msra.mxu0 0.0
    %441 = vmatprep.subr.mxu0 0.0
    %442 = vmatpush1.msra.mxu0 0.0
    %443 = vmatprep.subr.mxu0 0.0
    %444 = vmatpush1.msra.mxu0 0.0
    %445 = vmatprep.subr.mxu0 0.0
    %446 = vmatpush1.msra.mxu0 0.0
    %447 = vmatprep.subr.mxu0 0.0
    %448 = vmatpush1.msra.mxu0 0.0
    %449 = vmatprep.subr.mxu0 0.0
    %450 = vmatpush1.msra.mxu0 0.0
    %451 = vmatprep.subr.mxu0 0.0
    %452 = vmatpush1.msra.mxu0 0.0
    %453 = vmatprep.subr.mxu0 0.0
    %454 = vmatpush1.msra.mxu0 0.0
    %455 = vmatprep.subr.mxu0 0.0
    %456 = vmatpush1.msra.mxu0 0.0
    %457 = vmatprep.subr.mxu0 0.0
    %458 = vmatpush1.msra.mxu0 0.0
    %459 = vmatprep.subr.mxu0 0.0
    %460 = vmatpush1.msra.mxu0 0.0
    %461 = vmatprep.mubr.f32.mxu0 0.0
    %462 = vmatmul.mubr.f32.gmra.mrb[0].mxu0 %v395
    %v463 = vpop.f32.mrb[0].mxu0
    %v464 = vadd.f32 %v392, %v463
    %v465 = vpop.f32.mrb[0].mxu0
    %466 = vdwg.mxu0
    %v467 = vld [vmem:[%s2] sm:$0xff]
    %v468 = vadd.f32 %v467, %v464
    %469 = vst.msk [vmem:[#allocation5] sm:$0xff] %vm54, %v468
    // Predicated region
    $region46: #{tpu_custom_call.1} parent=1 // pred_check
      _
    $region47: #{tpu_custom_call.1} parent=1 // pred_check_branch
      %471 = sbr.rel (0) target = $region49
    $region48: #{tpu_custom_call.1} parent=1 // pred_region
      %s473 = ssub.s32 128, 128
      %474 = vsyncadd [#allocation4], %s473
      %s476 = sshll.u32 [#allocation5], 4
      %s477 = int_to_ptr.vmem [resolvable:$true] %s476
      %479 = dma.vmem_to_hbm [thread:$0]  %s477, 128, %s10, [#allocation4]
    $region49: #{tpu_custom_call.1} parent=1 // pred_fallthru
      _
    // Predicated region
    $region50: #{tpu_custom_call.1} parent=1 // pred_check
      _
    $region51: #{tpu_custom_call.1} parent=1 // pred_check_branch
      %481 = sbr.rel (0) target = $region53
    $region52: #{tpu_custom_call.1} parent=1 // pred_region
      %482 = dma.done [#allocation4], 128
    $region53: #{tpu_custom_call.1} parent=1 // pred_fallthru
      _
    %483 = vsyncpa [#allocation3], 1
    %484 = vsyncpa [#allocation4], 1

// kernel: tpu_custom_call.1
$region0: #{tpu_custom_call.1}
  #allocation0 [shape = 'u32[]', space=smem, size = 0x4, offset = 0x4, fixed_abs, tag = 'smem constant byte address 0x4 - core index']
  #allocation1 [shape = 'u32[144,128]{1,0:T(1,128)}', space=vmem, size = 0x12000, scoped, tag = 'internal scratch']
  %s0 = inlined_call_operand.vmem [shape: f32[8,8], index: 0, kind: input, shape index: {}]
  %s1 = inlined_call_operand.vmem [shape: f32[8,8], index: 1, kind: input, shape index: {}]
  %s2 = inlined_call_operand.vmem [shape: f32[8,8], index: 2, kind: input, shape index: {}]
  %s3 = inlined_call_operand.vmem [shape: f32[8,32], index: 3, kind: input, shape index: {}]
  %s4 = inlined_call_operand.vmem [shape: f32[8,32], index: 4, kind: input, shape index: {}]
  %s5 = inlined_call_operand.vmem [shape: f32[1,32], index: 5, kind: input, shape index: {}]
  %s6 = inlined_call_operand.hbm [shape: f32[2,32,32], index: 6, kind: input, shape index: {}]
  %s7 = inlined_call_operand.vmem [shape: f32[2,1,32], index: 7, kind: input, shape index: {}]
  %s8 = inlined_call_operand.vmem [shape: f32[32,8], index: 8, kind: input, shape index: {}]
  %s9 = inlined_call_operand.vmem [shape: f32[1,8], index: 9, kind: input, shape index: {}]
  %s10 = inlined_call_operand.hbm [shape: f32[8,8], index: 10, kind: output, shape index: {}]
  %s11 = sld [smem:[#allocation0]]
  $region54: #{tpu_custom_call.1} parent=0
    _
  %s13 = ssub.s32 1, %s11
  %s14 = scalar_select 0, %s13, %s11
  $region1: #{tpu_custom_call.1} parent=0
    #allocation2 [shape = 'u8[32768]{0}', space=vmem, size = 0x8000, scoped, tag = 'input window, operand 6, single buffered']
    #allocation3 [shape = 's32[1]{0}', space=sflag, size = 0x4, scoped, tag = 'scoped memory for tpu_custom_call.1']
    #allocation4 [shape = 's32[1]{0}', space=sflag, size = 0x4, scoped, tag = 'scoped memory for tpu_custom_call.1']
    #allocation5 [shape = 'u8[4096]{0}', space=vmem, size = 0x1000, scoped, tag = 'output window, operand 0, single buffered']
    %15 = vsyncpa [#allocation3], 0
    %16 = vsyncpa [#allocation4], 0
    // Predicated region
    $region2: #{tpu_custom_call.1} parent=1 // pred_check
      _
    $region3: #{tpu_custom_call.1} parent=1 // pred_check_branch
      %18 = sbr.rel (0) target = $region5
    $region4: #{tpu_custom_call.1} parent=1 // pred_region
      _
    $region5: #{tpu_custom_call.1} parent=1 // pred_fallthru
      _
    // Predicated region
    $region6: #{tpu_custom_call.1} parent=1 // pred_check
      _
    $region7: #{tpu_custom_call.1} parent=1 // pred_check_branch
      %20 = sbr.rel (0) target = $region9
    $region8: #{tpu_custom_call.1} parent=1 // pred_region
      _
    $region9: #{tpu_custom_call.1} parent=1 // pred_fallthru
      _
    // Predicated region
    $region10: #{tpu_custom_call.1} parent=1 // pred_check
      _
    $region11: #{tpu_custom_call.1} parent=1 // pred_check_branch
      %22 = sbr.rel (0) target = $region13
    $region12: #{tpu_custom_call.1} parent=1 // pred_region
      _
    $region13: #{tpu_custom_call.1} parent=1 // pred_fallthru
      _
    // Predicated region
    $region14: #{tpu_custom_call.1} parent=1 // pred_check
      _
    $region15: #{tpu_custom_call.1} parent=1 // pred_check_branch
      %24 = sbr.rel (0) target = $region17
    $region16: #{tpu_custom_call.1} parent=1 // pred_region
      _
    $region17: #{tpu_custom_call.1} parent=1 // pred_fallthru
      _
    // Predicated region
    $region18: #{tpu_custom_call.1} parent=1 // pred_check
      _
    $region19: #{tpu_custom_call.1} parent=1 // pred_check_branch
      %26 = sbr.rel (0) target = $region21
    $region20: #{tpu_custom_call.1} parent=1 // pred_region
      _
    $region21: #{tpu_custom_call.1} parent=1 // pred_fallthru
      _
    // Predicated region
    $region22: #{tpu_custom_call.1} parent=1 // pred_check
      _
    $region23: #{tpu_custom_call.1} parent=1 // pred_check_branch
      %28 = sbr.rel (0) target = $region25
    $region24: #{tpu_custom_call.1} parent=1 // pred_region
      _
    $region25: #{tpu_custom_call.1} parent=1 // pred_fallthru
      _
    // Predicated region
    $region26: #{tpu_custom_call.1} parent=1 // pred_check
      _
    $region27: #{tpu_custom_call.1} parent=1 // pred_check_branch
      %30 = sbr.rel (0) target = $region29
    $region28: #{tpu_custom_call.1} parent=1 // pred_region
      %s32 = ssub.s32 1024, 1024
      %33 = vsyncadd [#allocation3], %s32
      %s34 = sshll.u32 [#allocation2], 4
      %s35 = int_to_ptr.vmem [resolvable:$true] %s34
      %40 = dma.hbm_to_vmem [thread:$0]  %s6, 1024, %s35, [#allocation3], 128, 128, 8
    $region29: #{tpu_custom_call.1} parent=1 // pred_fallthru
      _
    // Predicated region
    $region30: #{tpu_custom_call.1} parent=1 // pred_check
      _
    $region31: #{tpu_custom_call.1} parent=1 // pred_check_branch
      %42 = sbr.rel (0) target = $region33
    $region32: #{tpu_custom_call.1} parent=1 // pred_region
      _
    $region33: #{tpu_custom_call.1} parent=1 // pred_fallthru
      _
    // Predicated region
    $region34: #{tpu_custom_call.1} parent=1 // pred_check
      _
    $region35: #{tpu_custom_call.1} parent=1 // pred_check_branch
      %44 = sbr.rel (0) target = $region37
    $region36: #{tpu_custom_call.1} parent=1 // pred_region
      _
    $region37: #{tpu_custom_call.1} parent=1 // pred_fallthru
      _
    // Predicated region
    $region38: #{tpu_custom_call.1} parent=1 // pred_check
      _
    $region39: #{tpu_custom_call.1} parent=1 // pred_check_branch
      %46 = sbr.rel (0) target = $region41
    $region40: #{tpu_custom_call.1} parent=1 // pred_region
      _
    $region41: #{tpu_custom_call.1} parent=1 // pred_fallthru
      _
    // Predicated region
    $region42: #{tpu_custom_call.1} parent=1 // pred_check
      _
    $region43: #{tpu_custom_call.1} parent=1 // pred_check_branch
      %48 = sbr.rel (0) target = $region45
    $region44: #{tpu_custom_call.1} parent=1 // pred_region
      %49 = dma.done [#allocation3], 1024
    $region45: #{tpu_custom_call.1} parent=1 // pred_fallthru
      _
    %v50 = vld [vmem:[%s0] sm:$0xff]
    %v51 = vld [vmem:[%s3] sm:$0xff]
    %v52 = vld [vmem:[%s1] sm:$0xff]
    %v53 = vld [vmem:[%s4] sm:$0xff]
    %vm54 = vcmask 64512
    %v56 = vsel %vm54, %v52, 0
    %58 = vmatprep.subr.mxu0 0.0
    %59 = vmatpush1.msra.mxu0 %v53
    %60 = vmatprep.subr.mxu0 0.0
    %61 = vmatpush1.msra.mxu0 0.0
    %62 = vmatprep.subr.mxu0 0.0
    %63 = vmatpush1.msra.mxu0 0.0
    %64 = vmatprep.subr.mxu0 0.0
    %65 = vmatpush1.msra.mxu0 0.0
    %66 = vmatprep.subr.mxu0 0.0
    %67 = vmatpush1.msra.mxu0 0.0
    %68 = vmatprep.subr.mxu0 0.0
    %69 = vmatpush1.msra.mxu0 0.0
    %70 = vmatprep.subr.mxu0 0.0
    %71 = vmatpush1.msra.mxu0 0.0
    %72 = vmatprep.subr.mxu0 0.0
    %73 = vmatpush1.msra.mxu0 0.0
    %74 = vmatprep.subr.mxu0 0.0
    %75 = vmatpush1.msra.mxu0 0.0
    %76 = vmatprep.subr.mxu0 0.0
    %77 = vmatpush1.msra.mxu0 0.0
    %78 = vmatprep.subr.mxu0 0.0
    %79 = vmatpush1.msra.mxu0 0.0
    %80 = vmatprep.subr.mxu0 0.0
    %81 = vmatpush1.msra.mxu0 0.0
    %82 = vmatprep.subr.mxu0 0.0
    %83 = vmatpush1.msra.mxu0 0.0
    %84 = vmatprep.subr.mxu0 0.0
    %85 = vmatpush1.msra.mxu0 0.0
    %86 = vmatprep.subr.mxu0 0.0
    %87 = vmatpush1.msra.mxu0 0.0
    %88 = vmatprep.subr.mxu0 0.0
    %89 = vmatpush1.msra.mxu0 0.0
    %90 = vmatprep.subr.mxu0 0.0
    %91 = vmatpush1.msra.mxu0 0.0
    %92 = vmatprep.subr.mxu0 0.0
    %93 = vmatpush1.msra.mxu0 0.0
    %94 = vmatprep.subr.mxu0 0.0
    %95 = vmatpush1.msra.mxu0 0.0
    %96 = vmatprep.subr.mxu0 0.0
    %97 = vmatpush1.msra.mxu0 0.0
    %98 = vmatprep.subr.mxu0 0.0
    %99 = vmatpush1.msra.mxu0 0.0
    %100 = vmatprep.subr.mxu0 0.0
    %101 = vmatpush1.msra.mxu0 0.0
    %102 = vmatprep.subr.mxu0 0.0
    %103 = vmatpush1.msra.mxu0 0.0
    %104 = vmatprep.subr.mxu0 0.0
    %105 = vmatpush1.msra.mxu0 0.0
    %106 = vmatprep.subr.mxu0 0.0
    %107 = vmatpush1.msra.mxu0 0.0
    %108 = vmatprep.subr.mxu0 0.0
    %109 = vmatpush1.msra.mxu0 0.0
    %110 = vmatprep.subr.mxu0 0.0
    %111 = vmatpush1.msra.mxu0 0.0
    %112 = vmatprep.subr.mxu0 0.0
    %113 = vmatpush1.msra.mxu0 0.0
    %114 = vmatprep.subr.mxu0 0.0
    %115 = vmatpush1.msra.mxu0 0.0
    %116 = vmatprep.subr.mxu0 0.0
    %117 = vmatpush1.msra.mxu0 0.0
    %118 = vmatprep.subr.mxu0 0.0
    %119 = vmatpush1.msra.mxu0 0.0
    %120 = vmatprep.subr.mxu0 0.0
    %121 = vmatpush1.msra.mxu0 0.0
    %122 = vmatprep.mubr.f32.mxu0 0.0
    %123 = vmatmul.mubr.f32.gmra.mrb[0].mxu0 %v56
    %v124 = vpop.f32.mrb[0].mxu0
    %v125 = vadd.f32 0.0, %v124
    %v126 = vpop.f32.mrb[0].mxu0
    %127 = vdwg.mxu0
    %v129 = vsel %vm54, %v50, 0
    %131 = vmatprep.subr.mxu0 0.0
    %132 = vmatpush1.msra.mxu0 %v51
    %133 = vmatprep.subr.mxu0 0.0
    %134 = vmatpush1.msra.mxu0 0.0
    %135 = vmatprep.subr.mxu0 0.0
    %136 = vmatpush1.msra.mxu0 0.0
    %137 = vmatprep.subr.mxu0 0.0
    %138 = vmatpush1.msra.mxu0 0.0
    %139 = vmatprep.subr.mxu0 0.0
    %140 = vmatpush1.msra.mxu0 0.0
    %141 = vmatprep.subr.mxu0 0.0
    %142 = vmatpush1.msra.mxu0 0.0
    %143 = vmatprep.subr.mxu0 0.0
    %144 = vmatpush1.msra.mxu0 0.0
    %145 = vmatprep.subr.mxu0 0.0
    %146 = vmatpush1.msra.mxu0 0.0
    %147 = vmatprep.subr.mxu0 0.0
    %148 = vmatpush1.msra.mxu0 0.0
    %149 = vmatprep.subr.mxu0 0.0
    %150 = vmatpush1.msra.mxu0 0.0
    %151 = vmatprep.subr.mxu0 0.0
    %152 = vmatpush1.msra.mxu0 0.0
    %153 = vmatprep.subr.mxu0 0.0
    %154 = vmatpush1.msra.mxu0 0.0
    %155 = vmatprep.subr.mxu0 0.0
    %156 = vmatpush1.msra.mxu0 0.0
    %157 = vmatprep.subr.mxu0 0.0
    %158 = vmatpush1.msra.mxu0 0.0
    %159 = vmatprep.subr.mxu0 0.0
    %160 = vmatpush1.msra.mxu0 0.0
    %161 = vmatprep.subr.mxu0 0.0
    %162 = vmatpush1.msra.mxu0 0.0
    %163 = vmatprep.subr.mxu0 0.0
    %164 = vmatpush1.msra.mxu0 0.0
    %165 = vmatprep.subr.mxu0 0.0
    %166 = vmatpush1.msra.mxu0 0.0
    %167 = vmatprep.subr.mxu0 0.0
    %168 = vmatpush1.msra.mxu0 0.0
    %169 = vmatprep.subr.mxu0 0.0
    %170 = vmatpush1.msra.mxu0 0.0
    %171 = vmatprep.subr.mxu0 0.0
    %172 = vmatpush1.msra.mxu0 0.0
    %173 = vmatprep.subr.mxu0 0.0
    %174 = vmatpush1.msra.mxu0 0.0
    %175 = vmatprep.subr.mxu0 0.0
    %176 = vmatpush1.msra.mxu0 0.0
    %177 = vmatprep.subr.mxu0 0.0
    %178 = vmatpush1.msra.mxu0 0.0
    %179 = vmatprep.subr.mxu0 0.0
    %180 = vmatpush1.msra.mxu0 0.0
    %181 = vmatprep.subr.mxu0 0.0
    %182 = vmatpush1.msra.mxu0 0.0
    %183 = vmatprep.subr.mxu0 0.0
    %184 = vmatpush1.msra.mxu0 0.0
    %185 = vmatprep.subr.mxu0 0.0
    %186 = vmatpush1.msra.mxu0 0.0
    %187 = vmatprep.subr.mxu0 0.0
    %188 = vmatpush1.msra.mxu0 0.0
    %189 = vmatprep.subr.mxu0 0.0
    %190 = vmatpush1.msra.mxu0 0.0
    %191 = vmatprep.subr.mxu0 0.0
    %192 = vmatpush1.msra.mxu0 0.0
    %193 = vmatprep.subr.mxu0 0.0
    %194 = vmatpush1.msra.mxu0 0.0
    %195 = vmatprep.mubr.f32.mxu0 0.0
    %196 = vmatmul.mubr.f32.gmra.mrb[0].mxu0 %v129
    %v197 = vpop.f32.mrb[0].mxu0
    %v198 = vadd.f32 %v125, %v197
    %v199 = vpop.f32.mrb[0].mxu0
    %200 = vdwg.mxu0
    %v201 = vld [vmem:[%s5] sm:$0x1]
    %v203 = vlaneseq
    %v204 = vshrl.u32 %v203, 7
    %v205 = vsub.s32 0, %v204
    %v206 = vrot.slane %v201, %v205
    %v208 = vadd.f32 %v198, %v206
    %v209 = vmax.f32 %v208, 0.0
    %v210 = vld [vmem:[#allocation2] sm:$0xff]
    %v211 = vld [vmem:[#allocation2 + $0x8] sm:$0xff]
    %v212 = vld [vmem:[#allocation2 + $0x10] sm:$0xff]
    %v213 = vld [vmem:[#allocation2 + $0x18] sm:$0xff]
    %v214 = vld [vmem:[%s7] sm:$0x1]
    %v216 = vlaneseq
    %v217 = vshrl.u32 %v216, 7
    %v218 = vsub.s32 0, %v217
    %v219 = vrot.slane %v214, %v218
    %vm221 = vcmask 261120
    %v223 = vsel %vm221, %v209, 0
    %225 = vmatprep.subr.mxu0 0.0
    %226 = vmatpush1.msra.mxu0 %v210
    %227 = vmatprep.subr.mxu0 0.0
    %228 = vmatpush1.msra.mxu0 %v211
    %229 = vmatprep.subr.mxu0 0.0
    %230 = vmatpush1.msra.mxu0 %v212
    %231 = vmatprep.subr.mxu0 0.0
    %232 = vmatpush1.msra.mxu0 %v213
    %233 = vmatprep.subr.mxu0 0.0
    %234 = vmatpush1.msra.mxu0 0.0
    %235 = vmatprep.subr.mxu0 0.0
    %236 = vmatpush1.msra.mxu0 0.0
    %237 = vmatprep.subr.mxu0 0.0
    %238 = vmatpush1.msra.mxu0 0.0
    %239 = vmatprep.subr.mxu0 0.0
    %240 = vmatpush1.msra.mxu0 0.0
    %241 = vmatprep.subr.mxu0 0.0
    %242 = vmatpush1.msra.mxu0 0.0
    %243 = vmatprep.subr.mxu0 0.0
    %244 = vmatpush1.msra.mxu0 0.0
    %245 = vmatprep.subr.mxu0 0.0
    %246 = vmatpush1.msra.mxu0 0.0
    %247 = vmatprep.subr.mxu0 0.0
    %248 = vmatpush1.msra.mxu0 0.0
    %249 = vmatprep.subr.mxu0 0.0
    %250 = vmatpush1.msra.mxu0 0.0
    %251 = vmatprep.subr.mxu0 0.0
    %252 = vmatpush1.msra.mxu0 0.0
    %253 = vmatprep.subr.mxu0 0.0
    %254 = vmatpush1.msra.mxu0 0.0
    %255 = vmatprep.subr.mxu0 0.0
    %256 = vmatpush1.msra.mxu0 0.0
    %257 = vmatprep.subr.mxu0 0.0
    %258 = vmatpush1.msra.mxu0 0.0
    %259 = vmatprep.subr.mxu0 0.0
    %260 = vmatpush1.msra.mxu0 0.0
    %261 = vmatprep.subr.mxu0 0.0
    %262 = vmatpush1.msra.mxu0 0.0
    %263 = vmatprep.subr.mxu0 0.0
    %264 = vmatpush1.msra.mxu0 0.0
    %265 = vmatprep.subr.mxu0 0.0
    %266 = vmatpush1.msra.mxu0 0.0
    %267 = vmatprep.subr.mxu0 0.0
    %268 = vmatpush1.msra.mxu0 0.0
    %269 = vmatprep.subr.mxu0 0.0
    %270 = vmatpush1.msra.mxu0 0.0
    %271 = vmatprep.subr.mxu0 0.0
    %272 = vmatpush1.msra.mxu0 0.0
    %273 = vmatprep.subr.mxu0 0.0
    %274 = vmatpush1.msra.mxu0 0.0
    %275 = vmatprep.subr.mxu0 0.0
    %276 = vmatpush1.msra.mxu0 0.0
    %277 = vmatprep.subr.mxu0 0.0
    %278 = vmatpush1.msra.mxu0 0.0
    %279 = vmatprep.subr.mxu0 0.0
    %280 = vmatpush1.msra.mxu0 0.0
    %281 = vmatprep.subr.mxu0 0.0
    %282 = vmatpush1.msra.mxu0 0.0
    %283 = vmatprep.subr.mxu0 0.0
    %284 = vmatpush1.msra.mxu0 0.0
    %285 = vmatprep.subr.mxu0 0.0
    %286 = vmatpush1.msra.mxu0 0.0
    %287 = vmatprep.subr.mxu0 0.0
    %288 = vmatpush1.msra.mxu0 0.0
    %289 = vmatprep.mubr.f32.mxu0 0.0
    %290 = vmatmul.mubr.f32.gmra.mrb[0].mxu0 %v223
    %v291 = vpop.f32.mrb[0].mxu0
    %v292 = vadd.f32 %v219, %v291
    %v293 = vpop.f32.mrb[0].mxu0
    %294 = vdwg.mxu0
    %v295 = vmax.f32 %v292, 0.0
    %s296 = scalar_lea.vmem [#allocation2], 32
    %v297 = vld [vmem:[%s296] sm:$0xff]
    %v298 = vld [vmem:[%s296 + $0x8] sm:$0xff]
    %v299 = vld [vmem:[%s296 + $0x10] sm:$0xff]
    %v300 = vld [vmem:[%s296 + $0x18] sm:$0xff]
    %s301 = scalar_lea.vmem %s7, 1
    %v302 = vld [vmem:[%s301] sm:$0x1]
    %v304 = vlaneseq
    %v305 = vshrl.u32 %v304, 7
    %v306 = vsub.s32 0, %v305
    %v307 = vrot.slane %v302, %v306
    %v310 = vsel %vm221, %v295, 0
    %312 = vmatprep.subr.mxu0 0.0
    %313 = vmatpush1.msra.mxu0 %v297
    %314 = vmatprep.subr.mxu0 0.0
    %315 = vmatpush1.msra.mxu0 %v298
    %316 = vmatprep.subr.mxu0 0.0
    %317 = vmatpush1.msra.mxu0 %v299
    %318 = vmatprep.subr.mxu0 0.0
    %319 = vmatpush1.msra.mxu0 %v300
    %320 = vmatprep.subr.mxu0 0.0
    %321 = vmatpush1.msra.mxu0 0.0
    %322 = vmatprep.subr.mxu0 0.0
    %323 = vmatpush1.msra.mxu0 0.0
    %324 = vmatprep.subr.mxu0 0.0
    %325 = vmatpush1.msra.mxu0 0.0
    %326 = vmatprep.subr.mxu0 0.0
    %327 = vmatpush1.msra.mxu0 0.0
    %328 = vmatprep.subr.mxu0 0.0
    %329 = vmatpush1.msra.mxu0 0.0
    %330 = vmatprep.subr.mxu0 0.0
    %331 = vmatpush1.msra.mxu0 0.0
    %332 = vmatprep.subr.mxu0 0.0
    %333 = vmatpush1.msra.mxu0 0.0
    %334 = vmatprep.subr.mxu0 0.0
    %335 = vmatpush1.msra.mxu0 0.0
    %336 = vmatprep.subr.mxu0 0.0
    %337 = vmatpush1.msra.mxu0 0.0
    %338 = vmatprep.subr.mxu0 0.0
    %339 = vmatpush1.msra.mxu0 0.0
    %340 = vmatprep.subr.mxu0 0.0
    %341 = vmatpush1.msra.mxu0 0.0
    %342 = vmatprep.subr.mxu0 0.0
    %343 = vmatpush1.msra.mxu0 0.0
    %344 = vmatprep.subr.mxu0 0.0
    %345 = vmatpush1.msra.mxu0 0.0
    %346 = vmatprep.subr.mxu0 0.0
    %347 = vmatpush1.msra.mxu0 0.0
    %348 = vmatprep.subr.mxu0 0.0
    %349 = vmatpush1.msra.mxu0 0.0
    %350 = vmatprep.subr.mxu0 0.0
    %351 = vmatpush1.msra.mxu0 0.0
    %352 = vmatprep.subr.mxu0 0.0
    %353 = vmatpush1.msra.mxu0 0.0
    %354 = vmatprep.subr.mxu0 0.0
    %355 = vmatpush1.msra.mxu0 0.0
    %356 = vmatprep.subr.mxu0 0.0
    %357 = vmatpush1.msra.mxu0 0.0
    %358 = vmatprep.subr.mxu0 0.0
    %359 = vmatpush1.msra.mxu0 0.0
    %360 = vmatprep.subr.mxu0 0.0
    %361 = vmatpush1.msra.mxu0 0.0
    %362 = vmatprep.subr.mxu0 0.0
    %363 = vmatpush1.msra.mxu0 0.0
    %364 = vmatprep.subr.mxu0 0.0
    %365 = vmatpush1.msra.mxu0 0.0
    %366 = vmatprep.subr.mxu0 0.0
    %367 = vmatpush1.msra.mxu0 0.0
    %368 = vmatprep.subr.mxu0 0.0
    %369 = vmatpush1.msra.mxu0 0.0
    %370 = vmatprep.subr.mxu0 0.0
    %371 = vmatpush1.msra.mxu0 0.0
    %372 = vmatprep.subr.mxu0 0.0
    %373 = vmatpush1.msra.mxu0 0.0
    %374 = vmatprep.subr.mxu0 0.0
    %375 = vmatpush1.msra.mxu0 0.0
    %376 = vmatprep.mubr.f32.mxu0 0.0
    %377 = vmatmul.mubr.f32.gmra.mrb[0].mxu0 %v310
    %v378 = vpop.f32.mrb[0].mxu0
    %v379 = vadd.f32 %v307, %v378
    %v380 = vpop.f32.mrb[0].mxu0
    %381 = vdwg.mxu0
    %v382 = vmax.f32 %v379, 0.0
    %v383 = vld [vmem:[%s8] sm:$0xff]
    %v384 = vld [vmem:[%s8 + $0x8] sm:$0xff]
    %v385 = vld [vmem:[%s8 + $0x10] sm:$0xff]
    %v386 = vld [vmem:[%s8 + $0x18] sm:$0xff]
    %v387 = vld [vmem:[%s9] sm:$0x1]
    %v389 = vlaneseq
    %v390 = vshrl.u32 %v389, 7
    %v391 = vsub.s32 0, %v390
    %v392 = vrot.slane %v387, %v391
    %v395 = vsel %vm221, %v382, 0
    %397 = vmatprep.subr.mxu0 0.0
    %398 = vmatpush1.msra.mxu0 %v383
    %399 = vmatprep.subr.mxu0 0.0
    %400 = vmatpush1.msra.mxu0 %v384
    %401 = vmatprep.subr.mxu0 0.0
    %402 = vmatpush1.msra.mxu0 %v385
    %403 = vmatprep.subr.mxu0 0.0
    %404 = vmatpush1.msra.mxu0 %v386
    %405 = vmatprep.subr.mxu0 0.0
    %406 = vmatpush1.msra.mxu0 0.0
    %407 = vmatprep.subr.mxu0 0.0
    %408 = vmatpush1.msra.mxu0 0.0
    %409 = vmatprep.subr.mxu0 0.0
    %410 = vmatpush1.msra.mxu0 0.0
    %411 = vmatprep.subr.mxu0 0.0
    %412 = vmatpush1.msra.mxu0 0.0
    %413 = vmatprep.subr.mxu0 0.0
    %414 = vmatpush1.msra.mxu0 0.0
    %415 = vmatprep.subr.mxu0 0.0
    %416 = vmatpush1.msra.mxu0 0.0
    %417 = vmatprep.subr.mxu0 0.0
    %418 = vmatpush1.msra.mxu0 0.0
    %419 = vmatprep.subr.mxu0 0.0
    %420 = vmatpush1.msra.mxu0 0.0
    %421 = vmatprep.subr.mxu0 0.0
    %422 = vmatpush1.msra.mxu0 0.0
    %423 = vmatprep.subr.mxu0 0.0
    %424 = vmatpush1.msra.mxu0 0.0
    %425 = vmatprep.subr.mxu0 0.0
    %426 = vmatpush1.msra.mxu0 0.0
    %427 = vmatprep.subr.mxu0 0.0
    %428 = vmatpush1.msra.mxu0 0.0
    %429 = vmatprep.subr.mxu0 0.0
    %430 = vmatpush1.msra.mxu0 0.0
    %431 = vmatprep.subr.mxu0 0.0
    %432 = vmatpush1.msra.mxu0 0.0
    %433 = vmatprep.subr.mxu0 0.0
    %434 = vmatpush1.msra.mxu0 0.0
    %435 = vmatprep.subr.mxu0 0.0
    %436 = vmatpush1.msra.mxu0 0.0
    %437 = vmatprep.subr.mxu0 0.0
    %438 = vmatpush1.msra.mxu0 0.0
    %439 = vmatprep.subr.mxu0 0.0
    %440 = vmatpush1.msra.mxu0 0.0
    %441 = vmatprep.subr.mxu0 0.0
    %442 = vmatpush1.msra.mxu0 0.0
    %443 = vmatprep.subr.mxu0 0.0
    %444 = vmatpush1.msra.mxu0 0.0
    %445 = vmatprep.subr.mxu0 0.0
    %446 = vmatpush1.msra.mxu0 0.0
    %447 = vmatprep.subr.mxu0 0.0
    %448 = vmatpush1.msra.mxu0 0.0
    %449 = vmatprep.subr.mxu0 0.0
    %450 = vmatpush1.msra.mxu0 0.0
    %451 = vmatprep.subr.mxu0 0.0
    %452 = vmatpush1.msra.mxu0 0.0
    %453 = vmatprep.subr.mxu0 0.0
    %454 = vmatpush1.msra.mxu0 0.0
    %455 = vmatprep.subr.mxu0 0.0
    %456 = vmatpush1.msra.mxu0 0.0
    %457 = vmatprep.subr.mxu0 0.0
    %458 = vmatpush1.msra.mxu0 0.0
    %459 = vmatprep.subr.mxu0 0.0
    %460 = vmatpush1.msra.mxu0 0.0
    %461 = vmatprep.mubr.f32.mxu0 0.0
    %462 = vmatmul.mubr.f32.gmra.mrb[0].mxu0 %v395
    %v463 = vpop.f32.mrb[0].mxu0
    %v464 = vadd.f32 %v392, %v463
    %v465 = vpop.f32.mrb[0].mxu0
    %466 = vdwg.mxu0
    %v467 = vld [vmem:[%s2] sm:$0xff]
    %v468 = vadd.f32 %v467, %v464
    %469 = vst.msk [vmem:[#allocation5] sm:$0xff] %vm54, %v468
    // Predicated region
    $region46: #{tpu_custom_call.1} parent=1 // pred_check
      _
    $region47: #{tpu_custom_call.1} parent=1 // pred_check_branch
      %471 = sbr.rel (0) target = $region49
    $region48: #{tpu_custom_call.1} parent=1 // pred_region
      %s473 = ssub.s32 128, 128
      %474 = vsyncadd [#allocation4], %s473
      %s476 = sshll.u32 [#allocation5], 4
      %s477 = int_to_ptr.vmem [resolvable:$true] %s476
      %479 = dma.vmem_to_hbm [thread:$0]  %s477, 128, %s10, [#allocation4]
    $region49: #{tpu_custom_call.1} parent=1 // pred_fallthru
      _
    // Predicated region
    $region50: #{tpu_custom_call.1} parent=1 // pred_check
      _
    $region51: #{tpu_custom_call.1} parent=1 // pred_check_branch
      %481 = sbr.rel (0) target = $region53
    $region52: #{tpu_custom_call.1} parent=1 // pred_region
      %482 = dma.done [#allocation4], 128
    $region53: #{tpu_custom_call.1} parent=1 // pred_fallthru
      _
    %483 = vsyncpa [#allocation3], 1
    %484 = vsyncpa [#allocation4], 1

</llo_original>
